<compile_context>
chip_gen: v7x
topology: tpu7x:2x2x1
jax: 0.10.0
libtpu: 0.0.40
codegen_flags: <defaults>
</compile_context>

<pallas_src>
import functools

import jax
import jax.numpy as jnp
import numpy as np
from jax.experimental import pallas as pl
from jax.experimental.pallas import tpu as pltpu


# -----------------------------------------------------------------------------
# Trace-time hardware queries (conservative fallbacks so the kernel always runs).
# -----------------------------------------------------------------------------
def _vmem_capacity_bytes():
    try:
        return int(pltpu.get_tpu_info().vmem_capacity_bytes)
    except Exception:
        return 64 * 1024 * 1024          # v7x per-TC physical VMEM (smallest gen)


def _tensorcores_per_chip():
    try:
        kind = jax.devices()[0].device_kind.lower()
    except Exception:
        return 1
    return 2 if "v7" in kind else 1      # only v7x has 2 TensorCores per chip


# -----------------------------------------------------------------------------
# Tiling
# -----------------------------------------------------------------------------
def _tile_vmem_bytes(rows, cin, cout, k, in_item, out_item):
    """Per-step VMEM estimate: double-buffered in/out tiles, resident
    weights/bias/mask, and in-kernel f32 temporaries (xv, shifted, acc, y)."""
    io = 2 * rows * cin * in_item + 2 * rows * cout * out_item
    resident = 4 * (k * cin + cin * cout + cout + rows * k)
    temps = 4 * (3 * rows * cin + rows * cout)
    return io + resident + temps


def _pick_batch_tile(B, L, cin, cout, k, in_item, out_item, budget, min_steps):
    """Largest divisor of B whose (rows, C) tile is sublane-aligned, fits the
    temp-aware VMEM budget, and leaves >= min_steps grid steps (2 on v7x so the
    second TensorCore gets work; 1 elsewhere — halving tiles on 1-TC chips only
    doubles per-step overhead)."""
    best = None
    for bt in range(1, B + 1):
        if B % bt:
            continue
        rows = bt * L
        if rows % 8 != 0 and bt != B:
            continue
        if bt != 1 and (B // bt) < min_steps:
            continue
        if bt != 1 and _tile_vmem_bytes(rows, cin, cout, k, in_item, out_item) > budget:
            continue
        best = bt                        # ascending loop -> ends on largest valid bt
    return best if best is not None else B


# -----------------------------------------------------------------------------
# Kernel
# -----------------------------------------------------------------------------
def _dsconv1d_kernel(x_ref, wdw_ref, wpw_ref, beff_ref, mask_ref, o_ref, *,
                     k, pad, matmul_dtype):
    """x_ref: (rows, Cin) channels-last, rows = batch_tile * L (sequences stacked
    back-to-back along the sublane axis).  o_ref: (rows, Cout)."""
    rows = x_ref.shape[0]

    # Depthwise taps in f32 (mandatory on v5e: no bf16 VPU; also keeps the XLU
    # roll on an f32 operand so bf16 sublane packing never bites).
    xv = x_ref[...].astype(jnp.float32)      # (rows, Cin)
    wdw = wdw_ref[...]                       # (k, Cin)   f32 depthwise taps
    mask = mask_ref[...]                     # (rows, k)  trace-time-constant 0/1

    # Depthwise conv = k shifted multiply-accumulates.  The centre tap needs no
    # shift; the others use an XLU rotate plus the precomputed mask column that
    # reproduces Conv1d's zero padding and kills wrap-around across the stacked
    # sequences and across the tile boundary.
    acc = xv * wdw[pad:pad + 1, :]
    for dk in range(k):
        d = dk - pad                         # tap offset: y[l] += w[dk] * x[l + d]
        if d == 0:
            continue
        shifted = pltpu.roll(xv, shift=(-d) % rows, axis=0)   # shifted[r] == xv[r + d]
        acc = acc + (shifted * mask[:, dk:dk + 1]) * wdw[dk:dk + 1, :]

    # Pointwise 1x1 conv == one MXU matmul over the channel (lane) axis with
    # batch*seq folded onto the M axis; f32 accumulation always.
    y = jnp.dot(acc.astype(matmul_dtype), wpw_ref[...],
                preferred_element_type=jnp.float32)
    o_ref[...] = (y + beff_ref[...]).astype(o_ref.dtype)


# -----------------------------------------------------------------------------
# Channels-last core (no layout plumbing): (B, L, Cin) -> (B, L, Cout)
# -----------------------------------------------------------------------------
def dsconv1d_channels_last(x_bld, dw_weight, dw_bias, pw_weight, pw_bias, *,
                           batch_tile=None, matmul_dtype=jnp.float32,
                           out_dtype=jnp.float32):
    B, L, Cin = x_bld.shape
    Cout = pw_weight.shape[0]
    k = dw_weight.shape[-1]
    assert pw_weight.shape[1] == Cin
    assert k % 2 == 1, "even k changes the output length under padding=k//2"
    pad = k // 2

    # ---- weight prep (true Cin/Cout, no channel padding) ----
    w_dw = jnp.transpose(dw_weight[:, 0, :], (1, 0)).astype(jnp.float32)    # (k, Cin)
    w_pw = jnp.transpose(pw_weight[:, :, 0], (1, 0)).astype(matmul_dtype)   # (Cin, Cout)
    # Fold the depthwise bias through the pointwise conv (single in-kernel bias add).
    b_eff = (pw_bias.astype(jnp.float32)
             + dw_bias.astype(jnp.float32) @ w_pw.astype(jnp.float32))[None, :]

    # Activations: fold B,L onto the sublane / MXU-M axis; DMA in matmul_dtype.
    x_rows = x_bld.reshape(B * L, Cin).astype(matmul_dtype)

    in_item = jnp.dtype(matmul_dtype).itemsize
    out_item = jnp.dtype(out_dtype).itemsize

    cap = _vmem_capacity_bytes()
    # Temp-aware budgets: ~26 MiB on v7x (64 MiB physical VMEM), ~56 MiB on
    # v5e/v6e (128 MiB) so grid steps reach the >=512-row, ~85%-of-roofline regime.
    budget = (26 << 20) if cap <= (96 << 20) else (56 << 20)
    vmem_limit = int(min(cap - (4 << 20), budget + (8 << 20)))
    min_steps = 2 if _tensorcores_per_chip() >= 2 else 1

    bt = batch_tile if batch_tile is not None else _pick_batch_tile(
        B, L, Cin, Cout, k, in_item, out_item, budget, min_steps)
    assert B % bt == 0, (B, bt)
    rows = bt * L
    assert rows % 8 == 0 or bt == B, (
        "rows = batch_tile * L must be a multiple of 8 unless the block covers "
        "the whole batch (the (8,128) BlockSpec rule)")

    # Per-tap validity mask: compile-time constant of (bt, L, k).  1.0 where the
    # source index l + d lies inside [0, L).  Passed as a tiny resident input so
    # the kernel does no per-step iota/rem/compare work.
    l_pos = np.arange(rows) % L
    mask_np = np.stack(
        [((l_pos + (dk - pad) >= 0) & (l_pos + (dk - pad) < L)) for dk in range(k)],
        axis=1).astype(np.float32)
    mask = jnp.asarray(mask_np)

    kernel = functools.partial(_dsconv1d_kernel, k=k, pad=pad,
                               matmul_dtype=matmul_dtype)

    # Resident (constant-index) inputs: single-buffer them when they are big
    # enough to matter; tiny inputs keep the plain spec.
    def _resident_spec(shape, nbytes):
        if nbytes >= (1 << 20):
            try:
                return pl.BlockSpec(shape, lambda i: (0,) * len(shape),
                                    pipeline_mode=pl.Buffered(1))
            except Exception:
                pass
        return pl.BlockSpec(shape, lambda i: (0,) * len(shape))

    flops = 2 * B * L * Cin * (Cout + k)
    bytes_accessed = int(x_rows.size * in_item + B * L * Cout * out_item
                         + w_dw.size * 4 + Cin * Cout * in_item
                         + b_eff.size * 4 + mask.size * 4)

    out_rows = pl.pallas_call(
        kernel,
        out_shape=jax.ShapeDtypeStruct((B * L, Cout), out_dtype),
        grid=(B // bt,),
        in_specs=[
            pl.BlockSpec((rows, Cin), lambda i: (i, 0)),         # activations (batch-tiled)
            _resident_spec((k, Cin), w_dw.size * 4),             # depthwise taps
            _resident_spec((Cin, Cout), Cin * Cout * in_item),   # pointwise weight
            _resident_spec((1, Cout), Cout * 4),                 # fused bias
            _resident_spec((rows, k), rows * k * 4),             # halo validity mask
        ],
        out_specs=pl.BlockSpec((rows, Cout), lambda i: (i, 0)),
        compiler_params=pltpu.CompilerParams(
            dimension_semantics=("parallel",),
            vmem_limit_bytes=vmem_limit),
        cost_estimate=pl.CostEstimate(flops=flops, transcendentals=0,
                                      bytes_accessed=bytes_accessed),
    )(x_rows, w_dw, w_pw, b_eff, mask)

    return out_rows.reshape(B, L, Cout)


# -----------------------------------------------------------------------------
# PyTorch-layout wrapper: (B, Cin, L) -> (B, Cout, L)
# -----------------------------------------------------------------------------
def depthwise_separable_conv1d(x, dw_weight, dw_bias, pw_weight, pw_bias, *,
                               batch_tile=None, matmul_dtype=jnp.float32,
                               out_dtype=jnp.float32):
    """Forward of DepthwiseSeparableConv(dim=1): pointwise(depthwise(x)).

    The two transposes below are pure layout glue (no pad, no slice) done by XLA
    outside the kernel; callers that keep activations channels-last should call
    dsconv1d_channels_last directly and skip both HBM passes.
    """
    y = dsconv1d_channels_last(jnp.transpose(x, (0, 2, 1)), dw_weight, dw_bias,
                               pw_weight, pw_bias, batch_tile=batch_tile,
                               matmul_dtype=matmul_dtype, out_dtype=out_dtype)
    return jnp.transpose(y, (0, 2, 1))


# -----------------------------------------------------------------------------
# Pure-XLA reference with exact PyTorch Conv1d semantics (independent path).
# -----------------------------------------------------------------------------
def reference_forward(x, dw_weight, dw_bias, pw_weight, pw_bias):
    Cin = x.shape[1]
    k = dw_weight.shape[-1]
    dw = jax.lax.conv_general_dilated(
        x.astype(jnp.float32), dw_weight.astype(jnp.float32),
        window_strides=(1,), padding=[(k // 2, k // 2)],
        dimension_numbers=("NCH", "OIH", "NCH"),
        feature_group_count=Cin, precision=jax.lax.Precision.HIGHEST)
    dw = dw + dw_bias[None, :, None]
    pw = jax.lax.conv_general_dilated(
        dw, pw_weight.astype(jnp.float32),
        window_strides=(1,), padding=[(0, 0)],
        dimension_numbers=("NCH", "OIH", "NCH"),
        precision=jax.lax.Precision.HIGHEST)
    return pw + pw_bias[None, :, None]


if __name__ == "__main__":
    B, Cin, Cout, L, k = 8, 32, 16, 16, 3

    key = jax.random.PRNGKey(0)
    kx, kdw, kbd, kpw, kbp = jax.random.split(key, 5)

    x = jax.random.normal(kx, (B, Cin, L), jnp.float32)
    # Weights stored exactly as the PyTorch module stores them.  (Biases are
    # non-zero here to exercise the bias-fold path; forward semantics identical.)
    dw_weight = jax.random.normal(kdw, (Cin, 1, k), jnp.float32) * np.sqrt(2.0 / k)
    dw_bias = jax.random.normal(kbd, (Cin,), jnp.float32) * 0.1
    pw_weight = jax.random.normal(kpw, (Cout, Cin, 1), jnp.float32) * np.sqrt(1.0 / Cin)
    pw_bias = jax.random.normal(kbp, (Cout,), jnp.float32) * 0.1

    fwd = jax.jit(depthwise_separable_conv1d,
                  static_argnames=("batch_tile", "matmul_dtype", "out_dtype"))

    out = jax.block_until_ready(fwd(x, dw_weight, dw_bias, pw_weight, pw_bias))
    ref = jax.block_until_ready(
        reference_forward(x, dw_weight, dw_bias, pw_weight, pw_bias))

    assert out.shape == (B, Cout, L), out.shape
    # Tolerance covers the TPU MXU's default-precision f32 matmul path (bf16
    # passes); the depthwise section is exact f32 VPU math.
    np.testing.assert_allclose(np.asarray(out), np.asarray(ref), rtol=2e-2, atol=2e-2)

    # bf16 activations / weights / output with f32 accumulation (perf-review item);
    # looser tolerance for the documented precision loss.
    out_bf16 = jax.block_until_ready(
        fwd(x, dw_weight, dw_bias, pw_weight, pw_bias,
            matmul_dtype=jnp.bfloat16, out_dtype=jnp.bfloat16))
    np.testing.assert_allclose(np.asarray(out_bf16.astype(jnp.float32)),
                               np.asarray(ref), rtol=1e-1, atol=1e-1)

    print("KERNEL_OK")
</pallas_src>

<mosaic_0001>
module attributes {stable_mosaic.version = 11 : i64} {
  func.func @_dsconv1d_kernel(%arg0: i32, %arg1: memref<128x32xf32, #tpu.memory_space<vmem>>, %arg2: memref<3x32xf32, #tpu.memory_space<vmem>>, %arg3: memref<32x16xf32, #tpu.memory_space<vmem>>, %arg4: memref<1x16xf32, #tpu.memory_space<vmem>>, %arg5: memref<128x3xf32, #tpu.memory_space<vmem>>, %arg6: memref<128x16xf32, #tpu.memory_space<vmem>>) attributes {dimension_semantics = [#tpu.dimension_semantics<parallel>], iteration_bounds = array<i64: 1>, scalar_prefetch = 0 : i64, scratch_operands = 0 : i64, tpu.core_type = #tpu.core_type<tc>, window_params = [{transform_indices = @transform_0, window_bounds = array<i64: 128, 32>}, {pipeline_mode = #tpu.pipeline_mode<synchronous>, transform_indices = @transform_1, window_bounds = array<i64: 3, 32>}, {pipeline_mode = #tpu.pipeline_mode<synchronous>, transform_indices = @transform_2, window_bounds = array<i64: 32, 16>}, {pipeline_mode = #tpu.pipeline_mode<synchronous>, transform_indices = @transform_3, window_bounds = array<i64: 1, 16>}, {pipeline_mode = #tpu.pipeline_mode<synchronous>, transform_indices = @transform_4, window_bounds = array<i64: 128, 3>}, {transform_indices = @transform_5, window_bounds = array<i64: 128, 16>}]} {
    %c0 = arith.constant 0 : index
    %c0_0 = arith.constant 0 : index
    %0 = vector.load %arg1[%c0, %c0_0] : memref<128x32xf32, #tpu.memory_space<vmem>>, vector<128x32xf32>
    %c0_1 = arith.constant 0 : index
    %c0_2 = arith.constant 0 : index
    %1 = vector.load %arg2[%c0_1, %c0_2] : memref<3x32xf32, #tpu.memory_space<vmem>>, vector<3x32xf32>
    %c0_3 = arith.constant 0 : index
    %c0_4 = arith.constant 0 : index
    %2 = vector.load %arg5[%c0_3, %c0_4] : memref<128x3xf32, #tpu.memory_space<vmem>>, vector<128x3xf32>
    %3 = vector.extract_strided_slice %1 {offsets = [1, 0], sizes = [1, 32], strides = [1, 1]} : vector<3x32xf32> to vector<1x32xf32>
    %4 = vector.broadcast %3 : vector<1x32xf32> to vector<128x32xf32>
    %5 = arith.mulf %0, %4 : vector<128x32xf32>
    %c1_i32 = arith.constant 1 : i32
    %6 = tpu.dynamic_rotate %0 by %c1_i32 dim 0 : vector<128x32xf32>, i32 -> vector<128x32xf32>
    %7 = vector.extract_strided_slice %2 {offsets = [0, 0], sizes = [128, 1], strides = [1, 1]} : vector<128x3xf32> to vector<128x1xf32>
    %8 = vector.broadcast %7 : vector<128x1xf32> to vector<128x32xf32>
    %9 = arith.mulf %6, %8 : vector<128x32xf32>
    %10 = vector.extract_strided_slice %1 {offsets = [0, 0], sizes = [1, 32], strides = [1, 1]} : vector<3x32xf32> to vector<1x32xf32>
    %11 = vector.broadcast %10 : vector<1x32xf32> to vector<128x32xf32>
    %12 = arith.mulf %9, %11 : vector<128x32xf32>
    %13 = arith.addf %5, %12 : vector<128x32xf32>
    %c127_i32 = arith.constant 127 : i32
    %14 = tpu.dynamic_rotate %0 by %c127_i32 dim 0 : vector<128x32xf32>, i32 -> vector<128x32xf32>
    %15 = vector.extract_strided_slice %2 {offsets = [0, 2], sizes = [128, 1], strides = [1, 1]} : vector<128x3xf32> to vector<128x1xf32>
    %16 = vector.broadcast %15 : vector<128x1xf32> to vector<128x32xf32>
    %17 = arith.mulf %14, %16 : vector<128x32xf32>
    %18 = vector.extract_strided_slice %1 {offsets = [2, 0], sizes = [1, 32], strides = [1, 1]} : vector<3x32xf32> to vector<1x32xf32>
    %19 = vector.broadcast %18 : vector<1x32xf32> to vector<128x32xf32>
    %20 = arith.mulf %17, %19 : vector<128x32xf32>
    %21 = arith.addf %13, %20 : vector<128x32xf32>
    %c0_5 = arith.constant 0 : index
    %c0_6 = arith.constant 0 : index
    %22 = vector.load %arg3[%c0_5, %c0_6] : memref<32x16xf32, #tpu.memory_space<vmem>>, vector<32x16xf32>
    %cst = arith.constant dense<0.000000e+00> : vector<128x16xf32>
    %23 = tpu.matmul %21, %22, %cst {dimension_numbers = #tpu.dot_dimension_numbers<[1], [0], [0], [1], [0, 0, 1, 1], [], []>} : vector<128x32xf32>, vector<32x16xf32>, vector<128x16xf32> -> vector<128x16xf32>
    %c0_7 = arith.constant 0 : index
    %c0_8 = arith.constant 0 : index
    %24 = vector.load %arg4[%c0_7, %c0_8] : memref<1x16xf32, #tpu.memory_space<vmem>>, vector<1x16xf32>
    %25 = vector.broadcast %24 : vector<1x16xf32> to vector<128x16xf32>
    %26 = arith.addf %23, %25 : vector<128x16xf32>
    %c0_9 = arith.constant 0 : index
    %c0_10 = arith.constant 0 : index
    %27 = vector.load %arg6[%c0_9, %c0_10] : memref<128x16xf32, #tpu.memory_space<vmem>>, vector<128x16xf32>
    tpu.vector_store %arg6[%c0_9, %c0_10], %26 {strides = array<i32>} : memref<128x16xf32, #tpu.memory_space<vmem>>, vector<128x16xf32>,
    return
  }
  func.func @transform_0(%arg0: i32) -> (i32, i32) {
    %c0_i32 = arith.constant 0 : i32
    %c0_i32_0 = arith.constant 0 : i32
    return %arg0, %c0_i32 : i32, i32
  }
  func.func @transform_1(%arg0: i32) -> (i32, i32) {
    %c0_i32 = arith.constant 0 : i32
    %c0_i32_0 = arith.constant 0 : i32
    %c0_i32_1 = arith.constant 0 : i32
    return %c0_i32, %c0_i32_0 : i32, i32
  }
  func.func @transform_2(%arg0: i32) -> (i32, i32) {
    %c0_i32 = arith.constant 0 : i32
    %c0_i32_0 = arith.constant 0 : i32
    %c0_i32_1 = arith.constant 0 : i32
    return %c0_i32, %c0_i32_0 : i32, i32
  }
  func.func @transform_3(%arg0: i32) -> (i32, i32) {
    %c0_i32 = arith.constant 0 : i32
    %c0_i32_0 = arith.constant 0 : i32
    %c0_i32_1 = arith.constant 0 : i32
    return %c0_i32, %c0_i32_0 : i32, i32
  }
  func.func @transform_4(%arg0: i32) -> (i32, i32) {
    %c0_i32 = arith.constant 0 : i32
    %c0_i32_0 = arith.constant 0 : i32
    %c0_i32_1 = arith.constant 0 : i32
    return %c0_i32, %c0_i32_0 : i32, i32
  }
  func.func @transform_5(%arg0: i32) -> (i32, i32) {
    %c0_i32 = arith.constant 0 : i32
    %c0_i32_0 = arith.constant 0 : i32
    return %arg0, %c0_i32 : i32, i32
  }
}

</mosaic_0001>

<llo_original>
// kernel: depthwise_separable_conv1d.1
$region0: #{depthwise_separable_conv1d.1}
  #allocation0 [shape = 'u32[]', space=smem, size = 0x4, offset = 0x4, fixed_abs, tag = 'smem constant byte address 0x4 - core index']
  #allocation1 [shape = 'u32[144,128]{1,0:T(1,128)}', space=vmem, size = 0x12000, scoped, tag = 'internal scratch']
  %s0 = inlined_call_operand.hbm [shape: f32[128,32], index: 0, kind: input, shape index: {}]
  %s1 = inlined_call_operand.vmem [shape: f32[3,32], index: 1, kind: input, shape index: {}]
  %s2 = inlined_call_operand.vmem [shape: f32[32,16], index: 2, kind: input, shape index: {}]
  %s3 = inlined_call_operand.vmem [shape: f32[1,16], index: 3, kind: input, shape index: {}]
  %s4 = inlined_call_operand.hbm [shape: f32[128,3], index: 4, kind: input, shape index: {}]
  %s5 = inlined_call_operand.vmem [shape: f32[128,16], index: 5, kind: output, shape index: {}]
  %s6 = sld [smem:[#allocation0]]
  $region38: #{depthwise_separable_conv1d.1} parent=0
    _
  %s8 = ssub.s32 1, %s6
  %s9 = scalar_select 0, %s8, %s6
  $region1: #{depthwise_separable_conv1d.1} parent=0
    #allocation2 [shape = 'u8[65536]{0}', space=vmem, size = 0x10000, scoped, tag = 'input window, operand 0, single buffered']
    #allocation3 [shape = 's32[1]{0}', space=sflag, size = 0x4, scoped, tag = 'scoped memory for depthwise_separable_conv1d.1']
    #allocation4 [shape = 'u8[65536]{0}', space=vmem, size = 0x10000, scoped, tag = 'input window, operand 4, single buffered']
    #allocation5 [shape = 's32[1]{0}', space=sflag, size = 0x4, scoped, tag = 'scoped memory for depthwise_separable_conv1d.1']
    %10 = vsyncpa [#allocation3], 0
    %11 = vsyncpa [#allocation5], 0
    // Predicated region
    $region2: #{depthwise_separable_conv1d.1} parent=1 // pred_check
      _
    $region3: #{depthwise_separable_conv1d.1} parent=1 // pred_check_branch
      %13 = sbr.rel (0) target = $region5
    $region4: #{depthwise_separable_conv1d.1} parent=1 // pred_region
      %s15 = ssub.s32 2048, 2048
      %16 = vsyncadd [#allocation3], %s15
      %s17 = sshll.u32 [#allocation2], 4
      %s18 = int_to_ptr.vmem [resolvable:$true] %s17
      %23 = dma.hbm_to_vmem [thread:$0]  %s0, 2048, %s18, [#allocation3], 128, 128, 8
    $region5: #{depthwise_separable_conv1d.1} parent=1 // pred_fallthru
      _
    // Predicated region
    $region6: #{depthwise_separable_conv1d.1} parent=1 // pred_check
      _
    $region7: #{depthwise_separable_conv1d.1} parent=1 // pred_check_branch
      %25 = sbr.rel (0) target = $region9
    $region8: #{depthwise_separable_conv1d.1} parent=1 // pred_region
      _
    $region9: #{depthwise_separable_conv1d.1} parent=1 // pred_fallthru
      _
    // Predicated region
    $region10: #{depthwise_separable_conv1d.1} parent=1 // pred_check
      _
    $region11: #{depthwise_separable_conv1d.1} parent=1 // pred_check_branch
      %27 = sbr.rel (0) target = $region13
    $region12: #{depthwise_separable_conv1d.1} parent=1 // pred_region
      _
    $region13: #{depthwise_separable_conv1d.1} parent=1 // pred_fallthru
      _
    // Predicated region
    $region14: #{depthwise_separable_conv1d.1} parent=1 // pred_check
      _
    $region15: #{depthwise_separable_conv1d.1} parent=1 // pred_check_branch
      %29 = sbr.rel (0) target = $region17
    $region16: #{depthwise_separable_conv1d.1} parent=1 // pred_region
      _
    $region17: #{depthwise_separable_conv1d.1} parent=1 // pred_fallthru
      _
    // Predicated region
    $region18: #{depthwise_separable_conv1d.1} parent=1 // pred_check
      _
    $region19: #{depthwise_separable_conv1d.1} parent=1 // pred_check_branch
      %31 = sbr.rel (0) target = $region21
    $region20: #{depthwise_separable_conv1d.1} parent=1 // pred_region
      %s33 = ssub.s32 2048, 2048
      %34 = vsyncadd [#allocation5], %s33
      %s35 = sshll.u32 [#allocation4], 4
      %s36 = int_to_ptr.vmem [resolvable:$true] %s35
      %41 = dma.hbm_to_vmem [thread:$0]  %s4, 2048, %s36, [#allocation5], 128, 128, 8
    $region21: #{depthwise_separable_conv1d.1} parent=1 // pred_fallthru
      _
    // Predicated region
    $region22: #{depthwise_separable_conv1d.1} parent=1 // pred_check
      _
    $region23: #{depthwise_separable_conv1d.1} parent=1 // pred_check_branch
      %43 = sbr.rel (0) target = $region25
    $region24: #{depthwise_separable_conv1d.1} parent=1 // pred_region
      %44 = dma.done [#allocation3], 2048
    $region25: #{depthwise_separable_conv1d.1} parent=1 // pred_fallthru
      _
    // Predicated region
    $region26: #{depthwise_separable_conv1d.1} parent=1 // pred_check
      _
    $region27: #{depthwise_separable_conv1d.1} parent=1 // pred_check_branch
      %46 = sbr.rel (0) target = $region29
    $region28: #{depthwise_separable_conv1d.1} parent=1 // pred_region
      %47 = dma.done [#allocation5], 2048
    $region29: #{depthwise_separable_conv1d.1} parent=1 // pred_fallthru
      _
    %v48 = vld [vmem:[#allocation2] sm:$0xff]
    %v49 = vld [vmem:[#allocation2 + $0x8] sm:$0xff]
    %v50 = vld [vmem:[#allocation2 + $0x10] sm:$0xff]
    %v51 = vld [vmem:[#allocation2 + $0x18] sm:$0xff]
    %v52 = vld [vmem:[#allocation2 + $0x20] sm:$0xff]
    %v53 = vld [vmem:[#allocation2 + $0x28] sm:$0xff]
    %v54 = vld [vmem:[#allocation2 + $0x30] sm:$0xff]
    %v55 = vld [vmem:[#allocation2 + $0x38] sm:$0xff]
    %v56 = vld [vmem:[#allocation2 + $0x40] sm:$0xff]
    %v57 = vld [vmem:[#allocation2 + $0x48] sm:$0xff]
    %v58 = vld [vmem:[#allocation2 + $0x50] sm:$0xff]
    %v59 = vld [vmem:[#allocation2 + $0x58] sm:$0xff]
    %v60 = vld [vmem:[#allocation2 + $0x60] sm:$0xff]
    %v61 = vld [vmem:[#allocation2 + $0x68] sm:$0xff]
    %v62 = vld [vmem:[#allocation2 + $0x70] sm:$0xff]
    %v63 = vld [vmem:[#allocation2 + $0x78] sm:$0xff]
    %v64 = vld [vmem:[%s1] sm:$0x7]
    %v65 = vld [vmem:[#allocation4] sm:$0xff]
    %v66 = vld [vmem:[#allocation4 + $0x8] sm:$0xff]
    %v67 = vld [vmem:[#allocation4 + $0x10] sm:$0xff]
    %v68 = vld [vmem:[#allocation4 + $0x18] sm:$0xff]
    %v69 = vld [vmem:[#allocation4 + $0x20] sm:$0xff]
    %v70 = vld [vmem:[#allocation4 + $0x28] sm:$0xff]
    %v71 = vld [vmem:[#allocation4 + $0x30] sm:$0xff]
    %v72 = vld [vmem:[#allocation4 + $0x38] sm:$0xff]
    %v73 = vld [vmem:[#allocation4 + $0x40] sm:$0xff]
    %v74 = vld [vmem:[#allocation4 + $0x48] sm:$0xff]
    %v75 = vld [vmem:[#allocation4 + $0x50] sm:$0xff]
    %v76 = vld [vmem:[#allocation4 + $0x58] sm:$0xff]
    %v77 = vld [vmem:[#allocation4 + $0x60] sm:$0xff]
    %v78 = vld [vmem:[#allocation4 + $0x68] sm:$0xff]
    %v79 = vld [vmem:[#allocation4 + $0x70] sm:$0xff]
    %v80 = vld [vmem:[#allocation4 + $0x78] sm:$0xff]
    %v81 = vlaneseq
    %v82 = vshrl.u32 %v81, 7
    %v83 = vsub.s32 1, %v82
    %v84 = vrot.slane %v64, %v83
    %v85 = vmul.f32 %v48, %v84
    %v86 = vmul.f32 %v49, %v84
    %v87 = vmul.f32 %v50, %v84
    %v88 = vmul.f32 %v51, %v84
    %v89 = vmul.f32 %v52, %v84
    %v90 = vmul.f32 %v53, %v84
    %v91 = vmul.f32 %v54, %v84
    %v92 = vmul.f32 %v55, %v84
    %v93 = vmul.f32 %v56, %v84
    %v94 = vmul.f32 %v57, %v84
    %v95 = vmul.f32 %v58, %v84
    %v96 = vmul.f32 %v59, %v84
    %v97 = vmul.f32 %v60, %v84
    %v98 = vmul.f32 %v61, %v84
    %v99 = vmul.f32 %v62, %v84
    %v100 = vmul.f32 %v63, %v84
    %v101 = vrot.slane %v48, 7
    %v102 = vrot.slane %v49, 7
    %v103 = vrot.slane %v50, 7
    %v104 = vrot.slane %v51, 7
    %v105 = vrot.slane %v52, 7
    %v106 = vrot.slane %v53, 7
    %v107 = vrot.slane %v54, 7
    %v108 = vrot.slane %v55, 7
    %v109 = vrot.slane %v56, 7
    %v110 = vrot.slane %v57, 7
    %v111 = vrot.slane %v58, 7
    %v112 = vrot.slane %v59, 7
    %v113 = vrot.slane %v60, 7
    %v114 = vrot.slane %v61, 7
    %v115 = vrot.slane %v62, 7
    %v116 = vrot.slane %v63, 7
    %v117 = vlaneseq
    %v118 = vshrl.u32 %v117, 7
    %vm119 = vcmp.lt.s32.totalorder %v118, 1
    %v120 = vsel %vm119, %v115, %v116
    %v121 = vsel %vm119, %v114, %v115
    %v122 = vsel %vm119, %v113, %v114
    %v123 = vsel %vm119, %v112, %v113
    %v124 = vsel %vm119, %v111, %v112
    %v125 = vsel %vm119, %v110, %v111
    %v126 = vsel %vm119, %v109, %v110
    %v127 = vsel %vm119, %v108, %v109
    %v128 = vsel %vm119, %v107, %v108
    %v129 = vsel %vm119, %v106, %v107
    %v130 = vsel %vm119, %v105, %v106
    %v131 = vsel %vm119, %v104, %v105
    %v132 = vsel %vm119, %v103, %v104
    %v133 = vsel %vm119, %v102, %v103
    %v134 = vsel %vm119, %v101, %v102
    %v135 = vsel %vm119, %v116, %v101
    %137 = vset.pattern.permute.xlu0 0
    %138 = vperm.xlu0 %137, %v65
    %v139 = vpop.permute.xlu0 %138
    %142 = vset.pattern.permute.xlu0 0
    %143 = vperm.xlu0 %142, %v66
    %v144 = vpop.permute.xlu0 %143
    %147 = vset.pattern.permute.xlu0 0
    %148 = vperm.xlu0 %147, %v67
    %v149 = vpop.permute.xlu0 %148
    %152 = vset.pattern.permute.xlu0 0
    %153 = vperm.xlu0 %152, %v68
    %v154 = vpop.permute.xlu0 %153
    %157 = vset.pattern.permute.xlu0 0
    %158 = vperm.xlu0 %157, %v69
    %v159 = vpop.permute.xlu0 %158
    %162 = vset.pattern.permute.xlu0 0
    %163 = vperm.xlu0 %162, %v70
    %v164 = vpop.permute.xlu0 %163
    %167 = vset.pattern.permute.xlu0 0
    %168 = vperm.xlu0 %167, %v71
    %v169 = vpop.permute.xlu0 %168
    %172 = vset.pattern.permute.xlu0 0
    %173 = vperm.xlu0 %172, %v72
    %v174 = vpop.permute.xlu0 %173
    %177 = vset.pattern.permute.xlu0 0
    %178 = vperm.xlu0 %177, %v73
    %v179 = vpop.permute.xlu0 %178
    %182 = vset.pattern.permute.xlu0 0
    %183 = vperm.xlu0 %182, %v74
    %v184 = vpop.permute.xlu0 %183
    %187 = vset.pattern.permute.xlu0 0
    %188 = vperm.xlu0 %187, %v75
    %v189 = vpop.permute.xlu0 %188
    %192 = vset.pattern.permute.xlu0 0
    %193 = vperm.xlu0 %192, %v76
    %v194 = vpop.permute.xlu0 %193
    %197 = vset.pattern.permute.xlu0 0
    %198 = vperm.xlu0 %197, %v77
    %v199 = vpop.permute.xlu0 %198
    %202 = vset.pattern.permute.xlu0 0
    %203 = vperm.xlu0 %202, %v78
    %v204 = vpop.permute.xlu0 %203
    %207 = vset.pattern.permute.xlu0 0
    %208 = vperm.xlu0 %207, %v79
    %v209 = vpop.permute.xlu0 %208
    %212 = vset.pattern.permute.xlu0 0
    %213 = vperm.xlu0 %212, %v80
    %v214 = vpop.permute.xlu0 %213
    %v216 = vmul.f32 %v135, %v139
    %v217 = vmul.f32 %v134, %v144
    %v218 = vmul.f32 %v133, %v149
    %v219 = vmul.f32 %v132, %v154
    %v220 = vmul.f32 %v131, %v159
    %v221 = vmul.f32 %v130, %v164
    %v222 = vmul.f32 %v129, %v169
    %v223 = vmul.f32 %v128, %v174
    %v224 = vmul.f32 %v127, %v179
    %v225 = vmul.f32 %v126, %v184
    %v226 = vmul.f32 %v125, %v189
    %v227 = vmul.f32 %v124, %v194
    %v228 = vmul.f32 %v123, %v199
    %v229 = vmul.f32 %v122, %v204
    %v230 = vmul.f32 %v121, %v209
    %v231 = vmul.f32 %v120, %v214
    %v232 = vlaneseq
    %v233 = vshrl.u32 %v232, 7
    %v234 = vsub.s32 0, %v233
    %v235 = vrot.slane %v64, %v234
    %v236 = vmul.f32 %v216, %v235
    %v237 = vmul.f32 %v217, %v235
    %v238 = vmul.f32 %v218, %v235
    %v239 = vmul.f32 %v219, %v235
    %v240 = vmul.f32 %v220, %v235
    %v241 = vmul.f32 %v221, %v235
    %v242 = vmul.f32 %v222, %v235
    %v243 = vmul.f32 %v223, %v235
    %v244 = vmul.f32 %v224, %v235
    %v245 = vmul.f32 %v225, %v235
    %v246 = vmul.f32 %v226, %v235
    %v247 = vmul.f32 %v227, %v235
    %v248 = vmul.f32 %v228, %v235
    %v249 = vmul.f32 %v229, %v235
    %v250 = vmul.f32 %v230, %v235
    %v251 = vmul.f32 %v231, %v235
    %v252 = vadd.f32 %v85, %v236
    %v253 = vadd.f32 %v86, %v237
    %v254 = vadd.f32 %v87, %v238
    %v255 = vadd.f32 %v88, %v239
    %v256 = vadd.f32 %v89, %v240
    %v257 = vadd.f32 %v90, %v241
    %v258 = vadd.f32 %v91, %v242
    %v259 = vadd.f32 %v92, %v243
    %v260 = vadd.f32 %v93, %v244
    %v261 = vadd.f32 %v94, %v245
    %v262 = vadd.f32 %v95, %v246
    %v263 = vadd.f32 %v96, %v247
    %v264 = vadd.f32 %v97, %v248
    %v265 = vadd.f32 %v98, %v249
    %v266 = vadd.f32 %v99, %v250
    %v267 = vadd.f32 %v100, %v251
    %v268 = vrot.slane %v48, 1
    %v269 = vrot.slane %v49, 1
    %v270 = vrot.slane %v50, 1
    %v271 = vrot.slane %v51, 1
    %v272 = vrot.slane %v52, 1
    %v273 = vrot.slane %v53, 1
    %v274 = vrot.slane %v54, 1
    %v275 = vrot.slane %v55, 1
    %v276 = vrot.slane %v56, 1
    %v277 = vrot.slane %v57, 1
    %v278 = vrot.slane %v58, 1
    %v279 = vrot.slane %v59, 1
    %v280 = vrot.slane %v60, 1
    %v281 = vrot.slane %v61, 1
    %v282 = vrot.slane %v62, 1
    %v283 = vrot.slane %v63, 1
    %vm284 = vcmp.lt.s32.totalorder %v118, 7
    %v285 = vsel %vm284, %v282, %v283
    %v286 = vsel %vm284, %v281, %v282
    %v287 = vsel %vm284, %v280, %v281
    %v288 = vsel %vm284, %v279, %v280
    %v289 = vsel %vm284, %v278, %v279
    %v290 = vsel %vm284, %v277, %v278
    %v291 = vsel %vm284, %v276, %v277
    %v292 = vsel %vm284, %v275, %v276
    %v293 = vsel %vm284, %v274, %v275
    %v294 = vsel %vm284, %v273, %v274
    %v295 = vsel %vm284, %v272, %v273
    %v296 = vsel %vm284, %v271, %v272
    %v297 = vsel %vm284, %v270, %v271
    %v298 = vsel %vm284, %v269, %v270
    %v299 = vsel %vm284, %v268, %v269
    %v300 = vsel %vm284, %v283, %v268
    %301 = vset.pattern.permute.xlu0 2
    %302 = vperm.xlu0 %301, %v65
    %v303 = vpop.permute.xlu0 %302
    %305 = vset.pattern.permute.xlu0 2
    %306 = vperm.xlu0 %305, %v66
    %v307 = vpop.permute.xlu0 %306
    %309 = vset.pattern.permute.xlu0 2
    %310 = vperm.xlu0 %309, %v67
    %v311 = vpop.permute.xlu0 %310
    %313 = vset.pattern.permute.xlu0 2
    %314 = vperm.xlu0 %313, %v68
    %v315 = vpop.permute.xlu0 %314
    %317 = vset.pattern.permute.xlu0 2
    %318 = vperm.xlu0 %317, %v69
    %v319 = vpop.permute.xlu0 %318
    %321 = vset.pattern.permute.xlu0 2
    %322 = vperm.xlu0 %321, %v70
    %v323 = vpop.permute.xlu0 %322
    %325 = vset.pattern.permute.xlu0 2
    %326 = vperm.xlu0 %325, %v71
    %v327 = vpop.permute.xlu0 %326
    %329 = vset.pattern.permute.xlu0 2
    %330 = vperm.xlu0 %329, %v72
    %v331 = vpop.permute.xlu0 %330
    %333 = vset.pattern.permute.xlu0 2
    %334 = vperm.xlu0 %333, %v73
    %v335 = vpop.permute.xlu0 %334
    %337 = vset.pattern.permute.xlu0 2
    %338 = vperm.xlu0 %337, %v74
    %v339 = vpop.permute.xlu0 %338
    %341 = vset.pattern.permute.xlu0 2
    %342 = vperm.xlu0 %341, %v75
    %v343 = vpop.permute.xlu0 %342
    %345 = vset.pattern.permute.xlu0 2
    %346 = vperm.xlu0 %345, %v76
    %v347 = vpop.permute.xlu0 %346
    %349 = vset.pattern.permute.xlu0 2
    %350 = vperm.xlu0 %349, %v77
    %v351 = vpop.permute.xlu0 %350
    %353 = vset.pattern.permute.xlu0 2
    %354 = vperm.xlu0 %353, %v78
    %v355 = vpop.permute.xlu0 %354
    %357 = vset.pattern.permute.xlu0 2
    %358 = vperm.xlu0 %357, %v79
    %v359 = vpop.permute.xlu0 %358
    %361 = vset.pattern.permute.xlu0 2
    %362 = vperm.xlu0 %361, %v80
    %v363 = vpop.permute.xlu0 %362
    %v365 = vmul.f32 %v299, %v303
    %v366 = vmul.f32 %v298, %v307
    %v367 = vmul.f32 %v297, %v311
    %v368 = vmul.f32 %v296, %v315
    %v369 = vmul.f32 %v295, %v319
    %v370 = vmul.f32 %v294, %v323
    %v371 = vmul.f32 %v293, %v327
    %v372 = vmul.f32 %v292, %v331
    %v373 = vmul.f32 %v291, %v335
    %v374 = vmul.f32 %v290, %v339
    %v375 = vmul.f32 %v289, %v343
    %v376 = vmul.f32 %v288, %v347
    %v377 = vmul.f32 %v287, %v351
    %v378 = vmul.f32 %v286, %v355
    %v379 = vmul.f32 %v285, %v359
    %v380 = vmul.f32 %v300, %v363
    %v381 = vlaneseq
    %v382 = vshrl.u32 %v381, 7
    %v383 = vsub.s32 2, %v382
    %v384 = vrot.slane %v64, %v383
    %v385 = vmul.f32 %v365, %v384
    %v386 = vmul.f32 %v366, %v384
    %v387 = vmul.f32 %v367, %v384
    %v388 = vmul.f32 %v368, %v384
    %v389 = vmul.f32 %v369, %v384
    %v390 = vmul.f32 %v370, %v384
    %v391 = vmul.f32 %v371, %v384
    %v392 = vmul.f32 %v372, %v384
    %v393 = vmul.f32 %v373, %v384
    %v394 = vmul.f32 %v374, %v384
    %v395 = vmul.f32 %v375, %v384
    %v396 = vmul.f32 %v376, %v384
    %v397 = vmul.f32 %v377, %v384
    %v398 = vmul.f32 %v378, %v384
    %v399 = vmul.f32 %v379, %v384
    %v400 = vmul.f32 %v380, %v384
    %v401 = vadd.f32 %v252, %v385
    %v402 = vadd.f32 %v253, %v386
    %v403 = vadd.f32 %v254, %v387
    %v404 = vadd.f32 %v255, %v388
    %v405 = vadd.f32 %v256, %v389
    %v406 = vadd.f32 %v257, %v390
    %v407 = vadd.f32 %v258, %v391
    %v408 = vadd.f32 %v259, %v392
    %v409 = vadd.f32 %v260, %v393
    %v410 = vadd.f32 %v261, %v394
    %v411 = vadd.f32 %v262, %v395
    %v412 = vadd.f32 %v263, %v396
    %v413 = vadd.f32 %v264, %v397
    %v414 = vadd.f32 %v265, %v398
    %v415 = vadd.f32 %v266, %v399
    %v416 = vadd.f32 %v267, %v400
    %v417 = vld [vmem:[%s2] sm:$0xff]
    %v418 = vld [vmem:[%s2 + $0x8] sm:$0xff]
    %v419 = vld [vmem:[%s2 + $0x10] sm:$0xff]
    %v420 = vld [vmem:[%s2 + $0x18] sm:$0xff]
    %v421 = vld [vmem:[%s3] sm:$0x1]
    %v423 = vlaneseq
    %v424 = vshrl.u32 %v423, 7
    %v425 = vsub.s32 0, %v424
    %v426 = vrot.slane %v421, %v425
    %vm428 = vcmask 261120
    %v430 = vsel %vm428, %v401, 0
    %v433 = vsel %vm428, %v402, 0
    %v436 = vsel %vm428, %v403, 0
    %v439 = vsel %vm428, %v404, 0
    %v442 = vsel %vm428, %v405, 0
    %v445 = vsel %vm428, %v406, 0
    %v448 = vsel %vm428, %v407, 0
    %v451 = vsel %vm428, %v408, 0
    %v454 = vsel %vm428, %v409, 0
    %v457 = vsel %vm428, %v410, 0
    %v460 = vsel %vm428, %v411, 0
    %v463 = vsel %vm428, %v412, 0
    %v466 = vsel %vm428, %v413, 0
    %v469 = vsel %vm428, %v414, 0
    %v472 = vsel %vm428, %v415, 0
    %v475 = vsel %vm428, %v416, 0
    %477 = vmatprep.subr.mxu0 0.0
    %478 = vmatpush1.msra.mxu0 %v417
    %479 = vmatprep.subr.mxu0 0.0
    %480 = vmatpush1.msra.mxu0 %v418
    %481 = vmatprep.subr.mxu0 0.0
    %482 = vmatpush1.msra.mxu0 %v419
    %483 = vmatprep.subr.mxu0 0.0
    %484 = vmatpush1.msra.mxu0 %v420
    %485 = vmatprep.subr.mxu0 0.0
    %486 = vmatpush1.msra.mxu0 0.0
    %487 = vmatprep.subr.mxu0 0.0
    %488 = vmatpush1.msra.mxu0 0.0
    %489 = vmatprep.subr.mxu0 0.0
    %490 = vmatpush1.msra.mxu0 0.0
    %491 = vmatprep.subr.mxu0 0.0
    %492 = vmatpush1.msra.mxu0 0.0
    %493 = vmatprep.subr.mxu0 0.0
    %494 = vmatpush1.msra.mxu0 0.0
    %495 = vmatprep.subr.mxu0 0.0
    %496 = vmatpush1.msra.mxu0 0.0
    %497 = vmatprep.subr.mxu0 0.0
    %498 = vmatpush1.msra.mxu0 0.0
    %499 = vmatprep.subr.mxu0 0.0
    %500 = vmatpush1.msra.mxu0 0.0
    %501 = vmatprep.subr.mxu0 0.0
    %502 = vmatpush1.msra.mxu0 0.0
    %503 = vmatprep.subr.mxu0 0.0
    %504 = vmatpush1.msra.mxu0 0.0
    %505 = vmatprep.subr.mxu0 0.0
    %506 = vmatpush1.msra.mxu0 0.0
    %507 = vmatprep.subr.mxu0 0.0
    %508 = vmatpush1.msra.mxu0 0.0
    %509 = vmatprep.subr.mxu0 0.0
    %510 = vmatpush1.msra.mxu0 0.0
    %511 = vmatprep.subr.mxu0 0.0
    %512 = vmatpush1.msra.mxu0 0.0
    %513 = vmatprep.subr.mxu0 0.0
    %514 = vmatpush1.msra.mxu0 0.0
    %515 = vmatprep.subr.mxu0 0.0
    %516 = vmatpush1.msra.mxu0 0.0
    %517 = vmatprep.subr.mxu0 0.0
    %518 = vmatpush1.msra.mxu0 0.0
    %519 = vmatprep.subr.mxu0 0.0
    %520 = vmatpush1.msra.mxu0 0.0
    %521 = vmatprep.subr.mxu0 0.0
    %522 = vmatpush1.msra.mxu0 0.0
    %523 = vmatprep.subr.mxu0 0.0
    %524 = vmatpush1.msra.mxu0 0.0
    %525 = vmatprep.subr.mxu0 0.0
    %526 = vmatpush1.msra.mxu0 0.0
    %527 = vmatprep.subr.mxu0 0.0
    %528 = vmatpush1.msra.mxu0 0.0
    %529 = vmatprep.subr.mxu0 0.0
    %530 = vmatpush1.msra.mxu0 0.0
    %531 = vmatprep.subr.mxu0 0.0
    %532 = vmatpush1.msra.mxu0 0.0
    %533 = vmatprep.subr.mxu0 0.0
    %534 = vmatpush1.msra.mxu0 0.0
    %535 = vmatprep.subr.mxu0 0.0
    %536 = vmatpush1.msra.mxu0 0.0
    %537 = vmatprep.subr.mxu0 0.0
    %538 = vmatpush1.msra.mxu0 0.0
    %539 = vmatprep.subr.mxu0 0.0
    %540 = vmatpush1.msra.mxu0 0.0
    %541 = vmatprep.mubr.f32.mxu0 0.0
    %542 = vmatmul.mubr.f32.gmra.mrb[0].mxu0 %v430
    %v543 = vpop.f32.mrb[0].mxu0
    %v544 = vadd.f32 %v426, %v543
    %v545 = vpop.f32.mrb[0].mxu0
    %546 = vmatprep.mubr.f32.mxu0 0.0
    %547 = vmatmul.mubr.f32.gmra.mrb[0].mxu0 %v433
    %v548 = vpop.f32.mrb[0].mxu0
    %v549 = vadd.f32 %v426, %v548
    %v550 = vpop.f32.mrb[0].mxu0
    %551 = vmatprep.mubr.f32.mxu0 0.0
    %552 = vmatmul.mubr.f32.gmra.mrb[0].mxu0 %v436
    %v553 = vpop.f32.mrb[0].mxu0
    %v554 = vadd.f32 %v426, %v553
    %v555 = vpop.f32.mrb[0].mxu0
    %556 = vmatprep.mubr.f32.mxu0 0.0
    %557 = vmatmul.mubr.f32.gmra.mrb[0].mxu0 %v439
    %v558 = vpop.f32.mrb[0].mxu0
    %v559 = vadd.f32 %v426, %v558
    %v560 = vpop.f32.mrb[0].mxu0
    %561 = vmatprep.mubr.f32.mxu0 0.0
    %562 = vmatmul.mubr.f32.gmra.mrb[0].mxu0 %v442
    %v563 = vpop.f32.mrb[0].mxu0
    %v564 = vadd.f32 %v426, %v563
    %v565 = vpop.f32.mrb[0].mxu0
    %566 = vmatprep.mubr.f32.mxu0 0.0
    %567 = vmatmul.mubr.f32.gmra.mrb[0].mxu0 %v445
    %v568 = vpop.f32.mrb[0].mxu0
    %v569 = vadd.f32 %v426, %v568
    %v570 = vpop.f32.mrb[0].mxu0
    %571 = vmatprep.mubr.f32.mxu0 0.0
    %572 = vmatmul.mubr.f32.gmra.mrb[0].mxu0 %v448
    %v573 = vpop.f32.mrb[0].mxu0
    %v574 = vadd.f32 %v426, %v573
    %v575 = vpop.f32.mrb[0].mxu0
    %576 = vmatprep.mubr.f32.mxu0 0.0
    %577 = vmatmul.mubr.f32.gmra.mrb[0].mxu0 %v451
    %v578 = vpop.f32.mrb[0].mxu0
    %v579 = vadd.f32 %v426, %v578
    %v580 = vpop.f32.mrb[0].mxu0
    %581 = vmatprep.mubr.f32.mxu0 0.0
    %582 = vmatmul.mubr.f32.gmra.mrb[0].mxu0 %v454
    %v583 = vpop.f32.mrb[0].mxu0
    %v584 = vadd.f32 %v426, %v583
    %v585 = vpop.f32.mrb[0].mxu0
    %586 = vmatprep.mubr.f32.mxu0 0.0
    %587 = vmatmul.mubr.f32.gmra.mrb[0].mxu0 %v457
    %v588 = vpop.f32.mrb[0].mxu0
    %v589 = vadd.f32 %v426, %v588
    %v590 = vpop.f32.mrb[0].mxu0
    %591 = vmatprep.mubr.f32.mxu0 0.0
    %592 = vmatmul.mubr.f32.gmra.mrb[0].mxu0 %v460
    %v593 = vpop.f32.mrb[0].mxu0
    %v594 = vadd.f32 %v426, %v593
    %v595 = vpop.f32.mrb[0].mxu0
    %596 = vmatprep.mubr.f32.mxu0 0.0
    %597 = vmatmul.mubr.f32.gmra.mrb[0].mxu0 %v463
    %v598 = vpop.f32.mrb[0].mxu0
    %v599 = vadd.f32 %v426, %v598
    %v600 = vpop.f32.mrb[0].mxu0
    %601 = vmatprep.mubr.f32.mxu0 0.0
    %602 = vmatmul.mubr.f32.gmra.mrb[0].mxu0 %v466
    %v603 = vpop.f32.mrb[0].mxu0
    %v604 = vadd.f32 %v426, %v603
    %v605 = vpop.f32.mrb[0].mxu0
    %606 = vmatprep.mubr.f32.mxu0 0.0
    %607 = vmatmul.mubr.f32.gmra.mrb[0].mxu0 %v469
    %v608 = vpop.f32.mrb[0].mxu0
    %v609 = vadd.f32 %v426, %v608
    %v610 = vpop.f32.mrb[0].mxu0
    %611 = vmatprep.mubr.f32.mxu0 0.0
    %612 = vmatmul.mubr.f32.gmra.mrb[0].mxu0 %v472
    %v613 = vpop.f32.mrb[0].mxu0
    %v614 = vadd.f32 %v426, %v613
    %v615 = vpop.f32.mrb[0].mxu0
    %616 = vmatprep.mubr.f32.mxu0 0.0
    %617 = vmatmul.mubr.f32.gmra.mrb[0].mxu0 %v475
    %v618 = vpop.f32.mrb[0].mxu0
    %v619 = vadd.f32 %v426, %v618
    %v620 = vpop.f32.mrb[0].mxu0
    %621 = vdwg.mxu0
    %vm622 = vcmask 130048
    %623 = vst.msk [vmem:[%s5] sm:$0xff] %vm622, %v544
    %624 = vst.msk [vmem:[%s5 + $0x8] sm:$0xff] %vm622, %v549
    %625 = vst.msk [vmem:[%s5 + $0x10] sm:$0xff] %vm622, %v554
    %626 = vst.msk [vmem:[%s5 + $0x18] sm:$0xff] %vm622, %v559
    %627 = vst.msk [vmem:[%s5 + $0x20] sm:$0xff] %vm622, %v564
    %628 = vst.msk [vmem:[%s5 + $0x28] sm:$0xff] %vm622, %v569
    %629 = vst.msk [vmem:[%s5 + $0x30] sm:$0xff] %vm622, %v574
    %630 = vst.msk [vmem:[%s5 + $0x38] sm:$0xff] %vm622, %v579
    %631 = vst.msk [vmem:[%s5 + $0x40] sm:$0xff] %vm622, %v584
    %632 = vst.msk [vmem:[%s5 + $0x48] sm:$0xff] %vm622, %v589
    %633 = vst.msk [vmem:[%s5 + $0x50] sm:$0xff] %vm622, %v594
    %634 = vst.msk [vmem:[%s5 + $0x58] sm:$0xff] %vm622, %v599
    %635 = vst.msk [vmem:[%s5 + $0x60] sm:$0xff] %vm622, %v604
    %636 = vst.msk [vmem:[%s5 + $0x68] sm:$0xff] %vm622, %v609
    %637 = vst.msk [vmem:[%s5 + $0x70] sm:$0xff] %vm622, %v614
    %638 = vst.msk [vmem:[%s5 + $0x78] sm:$0xff] %vm622, %v619
    // Predicated region
    $region30: #{depthwise_separable_conv1d.1} parent=1 // pred_check
      _
    $region31: #{depthwise_separable_conv1d.1} parent=1 // pred_check_branch
      %640 = sbr.rel (0) target = $region33
    $region32: #{depthwise_separable_conv1d.1} parent=1 // pred_region
      _
    $region33: #{depthwise_separable_conv1d.1} parent=1 // pred_fallthru
      _
    // Predicated region
    $region34: #{depthwise_separable_conv1d.1} parent=1 // pred_check
      _
    $region35: #{depthwise_separable_conv1d.1} parent=1 // pred_check_branch
      %642 = sbr.rel (0) target = $region37
    $region36: #{depthwise_separable_conv1d.1} parent=1 // pred_region
      _
    $region37: #{depthwise_separable_conv1d.1} parent=1 // pred_fallthru
      _
    %643 = vsyncpa [#allocation3], 1
    %644 = vsyncpa [#allocation5], 1

</llo_original>
